<compile_context>
chip_gen: v5e
topology: v5e:2x2
jax: 0.10.0
libtpu: 0.0.40
codegen_flags: <defaults>
</compile_context>

<pallas_src>
import jax
import jax.numpy as jnp
from jax.experimental import pallas as pl
from jax.experimental.pallas import tpu as pltpu

LANE = 128


def _round_up(v, m):
    return (v + m - 1) // m * m


# ---------------------------------------------------------------------------
# Kernel: whole MLP fused, everything resident in VMEM.
#   x_ref : [TM, 17]    f32  (cast to bf16 in-kernel for the MXU)
#   w*_ref: bf16 weights ([K, out_p]); b*_ref: f32 biases [1, out_p]
#   o_ref : [TM, OUT_P] f32 or bf16 (lane-dense, unmasked store)
# ---------------------------------------------------------------------------
def actor_mlp_kernel(x_ref, w1_ref, b1_ref, w2_ref, b2_ref, w3_ref, b3_ref, o_ref):
    x = x_ref[...].astype(jnp.bfloat16)
    h1 = jnp.dot(x, w1_ref[...], preferred_element_type=jnp.float32) + b1_ref[...]
    h1 = jnp.maximum(h1, 0.0)
    h2 = jnp.dot(h1.astype(jnp.bfloat16), w2_ref[...],
                 preferred_element_type=jnp.float32) + b2_ref[...]
    h2 = jnp.maximum(h2, 0.0)
    h3 = jnp.dot(h2.astype(jnp.bfloat16), w3_ref[...],
                 preferred_element_type=jnp.float32) + b3_ref[...]
    o_ref[...] = jnp.tanh(h3).astype(o_ref.dtype)


# ---------------------------------------------------------------------------
# Parameter handling
# ---------------------------------------------------------------------------
def init_actor_params(key, input_dim, output_dim):
    """f32 params mirroring PyTorch nn.Linear default init.

    Weights are [in_features, out_features] (transposed vs PyTorch) so the
    kernel computes x @ W + b. Biases are [1, out_features]."""
    dims = [(input_dim, 400), (400, 300), (300, output_dim)]
    params = []
    for fan_in, fan_out in dims:
        key, kw, kb = jax.random.split(key, 3)
        bound = 1.0 / jnp.sqrt(float(fan_in))
        w = jax.random.uniform(kw, (fan_in, fan_out), jnp.float32, -bound, bound)
        b = jax.random.uniform(kb, (1, fan_out), jnp.float32, -bound, bound)
        params.extend([w, b])
    return tuple(params)


def prepare_padded_params(params_f32):
    """One-time prep:
      * output feature dims zero-padded to multiples of 128 (exact math),
      * K dims padded only where needed to match the previous layer's padded
        width (w2: 400->512, w3: 300->384); w1 keeps its real K of 17,
      * weights cast to bf16 (MXU inputs), biases stay f32."""
    w1, b1, w2, b2, w3, b3 = params_f32

    def pad_w(w, pad_k):
        in_p = _round_up(w.shape[0], LANE) if pad_k else w.shape[0]
        out_p = _round_up(w.shape[1], LANE)
        wp = jnp.zeros((in_p, out_p), jnp.float32).at[: w.shape[0], : w.shape[1]].set(w)
        return wp.astype(jnp.bfloat16)

    def pad_b(b):
        out_p = _round_up(b.shape[1], LANE)
        return jnp.zeros((1, out_p), jnp.float32).at[:, : b.shape[1]].set(b)

    return (pad_w(w1, pad_k=False), pad_b(b1),   # [17, 512]
            pad_w(w2, pad_k=True), pad_b(b2),    # [512, 384]
            pad_w(w3, pad_k=True), pad_b(b3))    # [384, 128]


# ---------------------------------------------------------------------------
# Wrapper
# ---------------------------------------------------------------------------
def _pick_batch_tile(B):
    """Batch tile: big tiles at large B (amortize ~0.35 us/step overhead),
    >=2 grid steps in the 128..1023 range (v7x megacore split), and a single
    unpadded tile for small B (block dims equal to full array dims)."""
    if B >= 1024:
        return 512
    if B >= 256:
        return 128
    if B >= 128:
        return 64
    return B


def actor_forward(x, padded_params, output_dim):
    """x: [B, input_dim] f32 -> [B, output_dim] f32."""
    w1, b1, w2, b2, w3, b3 = padded_params
    B, in_dim = x.shape
    H1_P = w1.shape[1]
    H2_P = w2.shape[1]
    OUT_P = w3.shape[1]

    tm = _pick_batch_tile(B)
    b_pad = _round_up(B, tm)
    grid = (b_pad // tm,)

    # Only pad batch rows (cheap, same dtype/width) and only when needed; the
    # padded rows compute tanh(bias) junk that is sliced off below.
    if b_pad != B:
        x = jnp.pad(x, ((0, b_pad - B), (0, 0)))

    # Large batches: bf16 writeback (the output stream dominates HBM traffic
    # there); small batches: f32 end-to-end.
    out_dtype = jnp.bfloat16 if B >= 1024 else jnp.float32
    out_bytes = 2 if out_dtype == jnp.bfloat16 else 4

    flops = 2 * b_pad * (in_dim * H1_P + H1_P * H2_P + H2_P * OUT_P)
    bytes_accessed = (
        b_pad * in_dim * 4
        + (w1.size + w2.size + w3.size) * 2
        + (b1.size + b2.size + b3.size) * 4
        + b_pad * OUT_P * out_bytes
    )
    cost = pl.CostEstimate(
        flops=flops, transcendentals=b_pad * output_dim, bytes_accessed=bytes_accessed
    )

    out = pl.pallas_call(
        actor_mlp_kernel,
        out_shape=jax.ShapeDtypeStruct((b_pad, OUT_P), out_dtype),
        grid_spec=pltpu.PrefetchScalarGridSpec(
            num_scalar_prefetch=0,
            grid=grid,
            in_specs=[
                pl.BlockSpec((tm, in_dim), lambda i: (i, 0)),    # x: per-step tile
                pl.BlockSpec((in_dim, H1_P), lambda i: (0, 0)),  # weights / biases:
                pl.BlockSpec((1, H1_P), lambda i: (0, 0)),       #   constant block ->
                pl.BlockSpec((H1_P, H2_P), lambda i: (0, 0)),    #   DMA'd once, stay
                pl.BlockSpec((1, H2_P), lambda i: (0, 0)),       #   VMEM-resident
                pl.BlockSpec((H2_P, OUT_P), lambda i: (0, 0)),
                pl.BlockSpec((1, OUT_P), lambda i: (0, 0)),
            ],
            out_specs=pl.BlockSpec((tm, OUT_P), lambda i: (i, 0)),
        ),
        compiler_params=pltpu.CompilerParams(
            dimension_semantics=("parallel",),  # megacore split on v7x
        ),
        cost_estimate=cost,
    )(x, w1, b1, w2, b2, w3, b3)

    return out[:B, :output_dim].astype(jnp.float32)


# ---------------------------------------------------------------------------
# References
# ---------------------------------------------------------------------------
def actor_reference_f32(x, params_f32):
    w1, b1, w2, b2, w3, b3 = params_f32
    h1 = jnp.maximum(x @ w1 + b1, 0.0)
    h2 = jnp.maximum(h1 @ w2 + b2, 0.0)
    return jnp.tanh(h2 @ w3 + b3)


def actor_reference_bf16(x, padded_params, output_dim):
    """Plain-JAX mirror of the kernel math (same padded bf16 weights, f32 acc)."""
    w1, b1, w2, b2, w3, b3 = padded_params
    h1 = jnp.maximum(
        jnp.dot(x.astype(jnp.bfloat16), w1, preferred_element_type=jnp.float32) + b1,
        0.0)
    h2 = jnp.maximum(
        jnp.dot(h1.astype(jnp.bfloat16), w2, preferred_element_type=jnp.float32) + b2,
        0.0)
    h3 = jnp.dot(h2.astype(jnp.bfloat16), w3, preferred_element_type=jnp.float32) + b3
    return jnp.tanh(h3)[:, :output_dim]


if __name__ == "__main__":
    # walker2d-v3: obs dim = 17, action dim = 6
    input_dim, output_dim, batch = 17, 6, 2

    key = jax.random.PRNGKey(0)
    key, kx = jax.random.split(key)
    x = jax.random.normal(kx, (batch, input_dim), jnp.float32)

    params_f32 = init_actor_params(key, input_dim, output_dim)
    padded_params = prepare_padded_params(params_f32)  # one-time pad + bf16 cast

    out = actor_forward(x, padded_params, output_dim)
    out = jax.block_until_ready(out)
    assert out.shape == (batch, output_dim)

    # Exact-math check vs a plain-JAX mirror of the kernel (same bf16 weights).
    ref_bf16 = actor_reference_bf16(x, padded_params, output_dim)
    assert jnp.allclose(out, ref_bf16, atol=1e-3, rtol=1e-3), "mismatch vs bf16 reference"

    # Sanity check vs the full-precision f32 reference (bf16 quantization noise).
    ref_f32 = actor_reference_f32(x, params_f32)
    assert jnp.allclose(out, ref_f32, atol=5e-2, rtol=5e-2), "mismatch vs f32 reference"

    print("KERNEL_OK")
</pallas_src>

<mosaic_0001>
module attributes {stable_mosaic.version = 11 : i64} {
  func.func @actor_mlp_kernel(%arg0: i32, %arg1: memref<2x17xf32, #tpu.memory_space<vmem>>, %arg2: memref<17x512xbf16, #tpu.memory_space<vmem>>, %arg3: memref<1x512xf32, #tpu.memory_space<vmem>>, %arg4: memref<512x384xbf16, #tpu.memory_space<vmem>>, %arg5: memref<1x384xf32, #tpu.memory_space<vmem>>, %arg6: memref<384x128xbf16, #tpu.memory_space<vmem>>, %arg7: memref<1x128xf32, #tpu.memory_space<vmem>>, %arg8: memref<2x128xf32, #tpu.memory_space<vmem>>) attributes {dimension_semantics = [#tpu.dimension_semantics<parallel>], iteration_bounds = array<i64: 1>, scalar_prefetch = 0 : i64, scratch_operands = 0 : i64, tpu.core_type = #tpu.core_type<tc>, window_params = [{transform_indices = @transform_0, window_bounds = array<i64: 2, 17>}, {pipeline_mode = #tpu.pipeline_mode<synchronous>, transform_indices = @transform_1, window_bounds = array<i64: 17, 512>}, {pipeline_mode = #tpu.pipeline_mode<synchronous>, transform_indices = @transform_2, window_bounds = array<i64: 1, 512>}, {pipeline_mode = #tpu.pipeline_mode<synchronous>, transform_indices = @transform_3, window_bounds = array<i64: 512, 384>}, {pipeline_mode = #tpu.pipeline_mode<synchronous>, transform_indices = @transform_4, window_bounds = array<i64: 1, 384>}, {pipeline_mode = #tpu.pipeline_mode<synchronous>, transform_indices = @transform_5, window_bounds = array<i64: 384, 128>}, {pipeline_mode = #tpu.pipeline_mode<synchronous>, transform_indices = @transform_6, window_bounds = array<i64: 1, 128>}, {transform_indices = @transform_7, window_bounds = array<i64: 2, 128>}]} {
    %c0 = arith.constant 0 : index
    %c0_0 = arith.constant 0 : index
    %0 = vector.load %arg1[%c0, %c0_0] : memref<2x17xf32, #tpu.memory_space<vmem>>, vector<2x17xf32>
    %1 = arith.truncf %0 : vector<2x17xf32> to vector<2x17xbf16>
    %c0_1 = arith.constant 0 : index
    %c0_2 = arith.constant 0 : index
    %2 = vector.load %arg2[%c0_1, %c0_2] : memref<17x512xbf16, #tpu.memory_space<vmem>>, vector<17x512xbf16>
    %cst = arith.constant dense<0.000000e+00> : vector<2x512xf32>
    %3 = tpu.matmul %1, %2, %cst {dimension_numbers = #tpu.dot_dimension_numbers<[1], [0], [0], [1], [0, 0, 1, 1], [], []>} : vector<2x17xbf16>, vector<17x512xbf16>, vector<2x512xf32> -> vector<2x512xf32>
    %c0_3 = arith.constant 0 : index
    %c0_4 = arith.constant 0 : index
    %4 = vector.load %arg3[%c0_3, %c0_4] : memref<1x512xf32, #tpu.memory_space<vmem>>, vector<1x512xf32>
    %5 = vector.broadcast %4 : vector<1x512xf32> to vector<2x512xf32>
    %6 = arith.addf %3, %5 : vector<2x512xf32>
    %cst_5 = arith.constant 0.000000e+00 : f32
    %7 = vector.broadcast %cst_5 : f32 to vector<2x512xf32>
    %8 = arith.maximumf %6, %7 : vector<2x512xf32>
    %9 = arith.truncf %8 : vector<2x512xf32> to vector<2x512xbf16>
    %c0_6 = arith.constant 0 : index
    %c0_7 = arith.constant 0 : index
    %10 = vector.load %arg4[%c0_6, %c0_7] : memref<512x384xbf16, #tpu.memory_space<vmem>>, vector<512x384xbf16>
    %cst_8 = arith.constant dense<0.000000e+00> : vector<2x384xf32>
    %11 = tpu.matmul %9, %10, %cst_8 {dimension_numbers = #tpu.dot_dimension_numbers<[1], [0], [0], [1], [0, 0, 1, 1], [], []>} : vector<2x512xbf16>, vector<512x384xbf16>, vector<2x384xf32> -> vector<2x384xf32>
    %c0_9 = arith.constant 0 : index
    %c0_10 = arith.constant 0 : index
    %12 = vector.load %arg5[%c0_9, %c0_10] : memref<1x384xf32, #tpu.memory_space<vmem>>, vector<1x384xf32>
    %13 = vector.broadcast %12 : vector<1x384xf32> to vector<2x384xf32>
    %14 = arith.addf %11, %13 : vector<2x384xf32>
    %cst_11 = arith.constant 0.000000e+00 : f32
    %15 = vector.broadcast %cst_11 : f32 to vector<2x384xf32>
    %16 = arith.maximumf %14, %15 : vector<2x384xf32>
    %17 = arith.truncf %16 : vector<2x384xf32> to vector<2x384xbf16>
    %c0_12 = arith.constant 0 : index
    %c0_13 = arith.constant 0 : index
    %18 = vector.load %arg6[%c0_12, %c0_13] : memref<384x128xbf16, #tpu.memory_space<vmem>>, vector<384x128xbf16>
    %cst_14 = arith.constant dense<0.000000e+00> : vector<2x128xf32>
    %19 = tpu.matmul %17, %18, %cst_14 {dimension_numbers = #tpu.dot_dimension_numbers<[1], [0], [0], [1], [0, 0, 1, 1], [], []>} : vector<2x384xbf16>, vector<384x128xbf16>, vector<2x128xf32> -> vector<2x128xf32>
    %c0_15 = arith.constant 0 : index
    %c0_16 = arith.constant 0 : index
    %20 = vector.load %arg7[%c0_15, %c0_16] : memref<1x128xf32, #tpu.memory_space<vmem>>, vector<1x128xf32>
    %21 = vector.broadcast %20 : vector<1x128xf32> to vector<2x128xf32>
    %22 = arith.addf %19, %21 : vector<2x128xf32>
    %23 = math.tanh %22 : vector<2x128xf32>
    %c0_17 = arith.constant 0 : index
    %c0_18 = arith.constant 0 : index
    %24 = vector.load %arg8[%c0_17, %c0_18] : memref<2x128xf32, #tpu.memory_space<vmem>>, vector<2x128xf32>
    tpu.vector_store %arg8[%c0_17, %c0_18], %23 {strides = array<i32>} : memref<2x128xf32, #tpu.memory_space<vmem>>, vector<2x128xf32>,
    return
  }
  func.func @transform_0(%arg0: i32) -> (i32, i32) {
    %c0_i32 = arith.constant 0 : i32
    %c0_i32_0 = arith.constant 0 : i32
    return %arg0, %c0_i32 : i32, i32
  }
  func.func @transform_1(%arg0: i32) -> (i32, i32) {
    %c0_i32 = arith.constant 0 : i32
    %c0_i32_0 = arith.constant 0 : i32
    %c0_i32_1 = arith.constant 0 : i32
    return %c0_i32, %c0_i32_0 : i32, i32
  }
  func.func @transform_2(%arg0: i32) -> (i32, i32) {
    %c0_i32 = arith.constant 0 : i32
    %c0_i32_0 = arith.constant 0 : i32
    %c0_i32_1 = arith.constant 0 : i32
    return %c0_i32, %c0_i32_0 : i32, i32
  }
  func.func @transform_3(%arg0: i32) -> (i32, i32) {
    %c0_i32 = arith.constant 0 : i32
    %c0_i32_0 = arith.constant 0 : i32
    %c0_i32_1 = arith.constant 0 : i32
    return %c0_i32, %c0_i32_0 : i32, i32
  }
  func.func @transform_4(%arg0: i32) -> (i32, i32) {
    %c0_i32 = arith.constant 0 : i32
    %c0_i32_0 = arith.constant 0 : i32
    %c0_i32_1 = arith.constant 0 : i32
    return %c0_i32, %c0_i32_0 : i32, i32
  }
  func.func @transform_5(%arg0: i32) -> (i32, i32) {
    %c0_i32 = arith.constant 0 : i32
    %c0_i32_0 = arith.constant 0 : i32
    %c0_i32_1 = arith.constant 0 : i32
    return %c0_i32, %c0_i32_0 : i32, i32
  }
  func.func @transform_6(%arg0: i32) -> (i32, i32) {
    %c0_i32 = arith.constant 0 : i32
    %c0_i32_0 = arith.constant 0 : i32
    %c0_i32_1 = arith.constant 0 : i32
    return %c0_i32, %c0_i32_0 : i32, i32
  }
  func.func @transform_7(%arg0: i32) -> (i32, i32) {
    %c0_i32 = arith.constant 0 : i32
    %c0_i32_0 = arith.constant 0 : i32
    return %arg0, %c0_i32 : i32, i32
  }
}

</mosaic_0001>

<llo_original>
// kernel: tpu_custom_call.1
$region0: #{tpu_custom_call.1}
  #allocation0 [shape = 'u32[]', space=smem, size = 0x4, offset = 0x4, fixed_abs, tag = 'smem constant byte address 0x4 - core index']
  #allocation1 [shape = 'u32[72,128]{1,0:T(1,128)}', space=vmem, size = 0x9000, scoped, tag = 'internal scratch']
  %s0 = inlined_call_operand.hbm [shape: f32[2,17], index: 0, kind: input, shape index: {}]
  %s1 = inlined_call_operand.hbm [shape: bf16[17,512], index: 1, kind: input, shape index: {}]
  %s2 = inlined_call_operand.hbm [shape: f32[1,512], index: 2, kind: input, shape index: {}]
  %s3 = inlined_call_operand.hbm [shape: bf16[512,384], index: 3, kind: input, shape index: {}]
  %s4 = inlined_call_operand.vmem [shape: f32[1,384], index: 4, kind: input, shape index: {}]
  %s5 = inlined_call_operand.hbm [shape: bf16[384,128], index: 5, kind: input, shape index: {}]
  %s6 = inlined_call_operand.vmem [shape: f32[1,128], index: 6, kind: input, shape index: {}]
  %s7 = inlined_call_operand.hbm [shape: f32[2,128], index: 7, kind: output, shape index: {}]
  %s8 = sld [smem:[#allocation0]]
  $region58: #{tpu_custom_call.1} parent=0
    _
  %s10 = ssub.s32 1, %s8
  %s11 = scalar_select 0, %s10, %s8
  $region1: #{tpu_custom_call.1} parent=0
    #allocation2 [shape = 'u8[1024]{0}', space=vmem, size = 0x400, scoped, tag = 'input window, operand 0, single buffered']
    #allocation3 [shape = 's32[1]{0}', space=sflag, size = 0x4, scoped, tag = 'scoped memory for tpu_custom_call.1']
    #allocation4 [shape = 's32[1]{0}', space=sflag, size = 0x4, scoped, tag = 'scoped memory for tpu_custom_call.1']
    #allocation5 [shape = 'u8[24576]{0}', space=vmem, size = 0x6000, scoped, tag = 'input window, operand 1, single buffered']
    #allocation6 [shape = 's32[1]{0}', space=sflag, size = 0x4, scoped, tag = 'scoped memory for tpu_custom_call.1']
    #allocation7 [shape = 'u8[2048]{0}', space=vmem, size = 0x800, scoped, tag = 'input window, operand 2, single buffered']
    #allocation8 [shape = 'u8[393216]{0}', space=vmem, size = 0x60000, scoped, tag = 'input window, operand 3, single buffered']
    #allocation9 [shape = 's32[1]{0}', space=sflag, size = 0x4, scoped, tag = 'scoped memory for tpu_custom_call.1']
    #allocation10 [shape = 'u8[98304]{0}', space=vmem, size = 0x18000, scoped, tag = 'input window, operand 5, single buffered']
    #allocation11 [shape = 'u8[1024]{0}', space=vmem, size = 0x400, scoped, tag = 'output window, operand 0, single buffered']
    %12 = vsyncpa [#allocation3], 0
    %13 = vsyncpa [#allocation6], 0
    %14 = vsyncpa [#allocation9], 0
    %15 = vsyncpa [#allocation4], 0
    // Predicated region
    $region2: #{tpu_custom_call.1} parent=1 // pred_check
      _
    $region3: #{tpu_custom_call.1} parent=1 // pred_check_branch
      %17 = sbr.rel (0) target = $region5
    $region4: #{tpu_custom_call.1} parent=1 // pred_region
      %19 = vsyncadd [#allocation3], 0
      %s21 = sshll.u32 %s0, 4
      %s22 = int_to_ptr.hbm [resolvable:$true] %s21
      %s23 = sshll.u32 [#allocation2], 4
      %s24 = int_to_ptr.vmem [resolvable:$true] %s23
      %26 = dma.hbm_to_vmem [thread:$0]  %s22, 32, %s24, [#allocation3]
    $region5: #{tpu_custom_call.1} parent=1 // pred_fallthru
      _
    // Predicated region
    $region6: #{tpu_custom_call.1} parent=1 // pred_check
      _
    $region7: #{tpu_custom_call.1} parent=1 // pred_check_branch
      %28 = sbr.rel (0) target = $region9
    $region8: #{tpu_custom_call.1} parent=1 // pred_region
      %30 = vsyncadd [#allocation6], 0
      %s31 = sshll.u32 %s1, 4
      %s32 = int_to_ptr.hbm [resolvable:$true] %s31
      %s33 = sshll.u32 [#allocation5], 4
      %s34 = int_to_ptr.vmem [resolvable:$true] %s33
      %39 = dma.hbm_to_vmem [thread:$0]  %s32, 768, %s34, [#allocation6], 256, 256, 16
    $region9: #{tpu_custom_call.1} parent=1 // pred_fallthru
      _
    // Predicated region
    $region10: #{tpu_custom_call.1} parent=1 // pred_check
      _
    $region11: #{tpu_custom_call.1} parent=1 // pred_check_branch
      %41 = sbr.rel (0) target = $region13
    $region12: #{tpu_custom_call.1} parent=1 // pred_region
      %43 = vsyncadd [#allocation6], 0
      %s45 = sshll.u32 %s2, 4
      %s46 = int_to_ptr.hbm [resolvable:$true] %s45
      %s47 = sshll.u32 [#allocation7], 4
      %s48 = int_to_ptr.vmem [resolvable:$true] %s47
      %50 = dma.hbm_to_vmem [thread:$0]  %s46, 64, %s48, [#allocation6]
    $region13: #{tpu_custom_call.1} parent=1 // pred_fallthru
      _
    // Predicated region
    $region14: #{tpu_custom_call.1} parent=1 // pred_check
      _
    $region15: #{tpu_custom_call.1} parent=1 // pred_check_branch
      %52 = sbr.rel (0) target = $region17
    $region16: #{tpu_custom_call.1} parent=1 // pred_region
      %54 = vsyncadd [#allocation9], 0
      %s55 = sshll.u32 %s3, 4
      %s56 = int_to_ptr.hbm [resolvable:$true] %s55
      %s57 = sshll.u32 [#allocation8], 4
      %s58 = int_to_ptr.vmem [resolvable:$true] %s57
      %63 = dma.hbm_to_vmem [thread:$0]  %s56, 12288, %s58, [#allocation9], 192, 192, 12
    $region17: #{tpu_custom_call.1} parent=1 // pred_fallthru
      _
    // Predicated region
    $region18: #{tpu_custom_call.1} parent=1 // pred_check
      _
    $region19: #{tpu_custom_call.1} parent=1 // pred_check_branch
      %65 = sbr.rel (0) target = $region21
    $region20: #{tpu_custom_call.1} parent=1 // pred_region
      _
    $region21: #{tpu_custom_call.1} parent=1 // pred_fallthru
      _
    // Predicated region
    $region22: #{tpu_custom_call.1} parent=1 // pred_check
      _
    $region23: #{tpu_custom_call.1} parent=1 // pred_check_branch
      %67 = sbr.rel (0) target = $region25
    $region24: #{tpu_custom_call.1} parent=1 // pred_region
      %69 = vsyncadd [#allocation9], 0
      %s70 = sshll.u32 %s5, 4
      %s71 = int_to_ptr.hbm [resolvable:$true] %s70
      %s72 = sshll.u32 [#allocation10], 4
      %s73 = int_to_ptr.vmem [resolvable:$true] %s72
      %78 = dma.hbm_to_vmem [thread:$0]  %s71, 3072, %s73, [#allocation9], 64, 64, 4
    $region25: #{tpu_custom_call.1} parent=1 // pred_fallthru
      _
    // Predicated region
    $region26: #{tpu_custom_call.1} parent=1 // pred_check
      _
    $region27: #{tpu_custom_call.1} parent=1 // pred_check_branch
      %80 = sbr.rel (0) target = $region29
    $region28: #{tpu_custom_call.1} parent=1 // pred_region
      _
    $region29: #{tpu_custom_call.1} parent=1 // pred_fallthru
      _
    // Predicated region
    $region30: #{tpu_custom_call.1} parent=1 // pred_check
      _
    $region31: #{tpu_custom_call.1} parent=1 // pred_check_branch
      %82 = sbr.rel (0) target = $region33
    $region32: #{tpu_custom_call.1} parent=1 // pred_region
      %84 = dma.done [#allocation3], 32
    $region33: #{tpu_custom_call.1} parent=1 // pred_fallthru
      _
    // Predicated region
    $region34: #{tpu_custom_call.1} parent=1 // pred_check
      _
    $region35: #{tpu_custom_call.1} parent=1 // pred_check_branch
      %86 = sbr.rel (0) target = $region37
    $region36: #{tpu_custom_call.1} parent=1 // pred_region
      %88 = dma.done [#allocation6], 768
    $region37: #{tpu_custom_call.1} parent=1 // pred_fallthru
      _
    // Predicated region
    $region38: #{tpu_custom_call.1} parent=1 // pred_check
      _
    $region39: #{tpu_custom_call.1} parent=1 // pred_check_branch
      %90 = sbr.rel (0) target = $region41
    $region40: #{tpu_custom_call.1} parent=1 // pred_region
      %92 = dma.done [#allocation6], 64
    $region41: #{tpu_custom_call.1} parent=1 // pred_fallthru
      _
    // Predicated region
    $region42: #{tpu_custom_call.1} parent=1 // pred_check
      _
    $region43: #{tpu_custom_call.1} parent=1 // pred_check_branch
      %94 = sbr.rel (0) target = $region45
    $region44: #{tpu_custom_call.1} parent=1 // pred_region
      %96 = dma.done [#allocation9], 12288
    $region45: #{tpu_custom_call.1} parent=1 // pred_fallthru
      _
    // Predicated region
    $region46: #{tpu_custom_call.1} parent=1 // pred_check
      _
    $region47: #{tpu_custom_call.1} parent=1 // pred_check_branch
      %98 = sbr.rel (0) target = $region49
    $region48: #{tpu_custom_call.1} parent=1 // pred_region
      %100 = dma.done [#allocation9], 3072
    $region49: #{tpu_custom_call.1} parent=1 // pred_fallthru
      _
    %v102 = vld [vmem:[#allocation2] sm:$0x3]
    %v103 = vpack.c.bf16 %v102, %v102
    %v104 = vld [vmem:[#allocation5] sm:$0xff]
    %v105 = vld [vmem:[#allocation5 + $0x8] sm:$0xff]
    %v106 = vld [vmem:[#allocation5 + $0x10] sm:$0xff]
    %v107 = vld [vmem:[#allocation5 + $0x18] sm:$0xff]
    %v108 = vld [vmem:[#allocation5 + $0x20] sm:$0x11]
    %v109 = vld [vmem:[#allocation5 + $0x28] sm:$0x11]
    %v110 = vld [vmem:[#allocation7] sm:$0xf]
    %v112 = vperm.slane %v110, 0
    %v113 = vperm.slane %v110, 1
    %v114 = vperm.slane %v110, 2
    %v115 = vperm.slane %v110, 3
    %v126 = vunpack.c.l.b16 %v104
    %v127 = vunpack.c.h.b16 %v104
    %v128 = vunpack.c.l.b16 %v105
    %v129 = vunpack.c.h.b16 %v105
    %v130 = vunpack.c.l.b16 %v106
    %v131 = vunpack.c.h.b16 %v106
    %v132 = vunpack.c.l.b16 %v107
    %v133 = vunpack.c.h.b16 %v107
    %v134 = vunpack.c.l.b16 %v108
    %v135 = vunpack.c.h.b16 %v108
    %v136 = vunpack.c.l.b16 %v109
    %v137 = vunpack.c.h.b16 %v109
    %v138 = vpack.c.b16 %v130, %v126
    %v139 = vpack.c.b16 %v131, %v127
    %v140 = vpack.c.b16 %v132, %v128
    %v141 = vpack.c.b16 %v133, %v129
    %v142 = vpack.c.b16 %v134, %v134
    %v143 = vpack.c.b16 %v135, %v135
    %v144 = vpack.c.b16 %v136, %v136
    %v145 = vpack.c.b16 %v137, %v137
    %vm150 = vcmask 138240
    %v152 = vsel %vm150, %v103, 0
    %vm154 = vcmask 1040384
    %v155 = vsel 0, 4294967295, 65535
    %v156 = vsel %vm154, %v155, 0
    %v158 = vand.u32 %v142, %v156
    %v161 = vand.u32 %v143, %v156
    %v164 = vand.u32 %v144, %v156
    %v167 = vand.u32 %v145, %v156
    %169 = vmatpush.bf16.msra.mxu0 0
    %170 = vmatpush.bf16.msra.mxu0 0
    %171 = vmatpush.bf16.msra.mxu0 0
    %172 = vmatpush.bf16.msra.mxu0 0
    %173 = vmatpush.bf16.msra.mxu0 0
    %174 = vmatpush.bf16.msra.mxu0 0
    %175 = vmatpush.bf16.msra.mxu0 %v158
    %176 = vmatpush.bf16.msra.mxu0 %v138
    %177 = vmatmul.bf16.gmra.mxu0 %v152
    %v178 = vpop.f32.mrf.mxu0
    %v179 = vadd.f32 %v112, %v178
    %v180 = vpop.f32.mrf.mxu0
    %181 = vdwg.mxu0
    %182 = vmatpush.bf16.msra.mxu0 0
    %183 = vmatpush.bf16.msra.mxu0 0
    %184 = vmatpush.bf16.msra.mxu0 0
    %185 = vmatpush.bf16.msra.mxu0 0
    %186 = vmatpush.bf16.msra.mxu0 0
    %187 = vmatpush.bf16.msra.mxu0 0
    %188 = vmatpush.bf16.msra.mxu0 %v161
    %189 = vmatpush.bf16.msra.mxu0 %v139
    %190 = vmatmul.bf16.gmra.mxu0 %v152
    %v191 = vpop.f32.mrf.mxu0
    %v192 = vadd.f32 %v113, %v191
    %v193 = vpop.f32.mrf.mxu0
    %194 = vdwg.mxu0
    %195 = vmatpush.bf16.msra.mxu0 0
    %196 = vmatpush.bf16.msra.mxu0 0
    %197 = vmatpush.bf16.msra.mxu0 0
    %198 = vmatpush.bf16.msra.mxu0 0
    %199 = vmatpush.bf16.msra.mxu0 0
    %200 = vmatpush.bf16.msra.mxu0 0
    %201 = vmatpush.bf16.msra.mxu0 %v164
    %202 = vmatpush.bf16.msra.mxu0 %v140
    %203 = vmatmul.bf16.gmra.mxu0 %v152
    %v204 = vpop.f32.mrf.mxu0
    %v205 = vadd.f32 %v114, %v204
    %v206 = vpop.f32.mrf.mxu0
    %207 = vdwg.mxu0
    %208 = vmatpush.bf16.msra.mxu0 0
    %209 = vmatpush.bf16.msra.mxu0 0
    %210 = vmatpush.bf16.msra.mxu0 0
    %211 = vmatpush.bf16.msra.mxu0 0
    %212 = vmatpush.bf16.msra.mxu0 0
    %213 = vmatpush.bf16.msra.mxu0 0
    %214 = vmatpush.bf16.msra.mxu0 %v167
    %215 = vmatpush.bf16.msra.mxu0 %v141
    %216 = vmatmul.bf16.gmra.mxu0 %v152
    %v217 = vpop.f32.mrf.mxu0
    %v218 = vadd.f32 %v115, %v217
    %v219 = vpop.f32.mrf.mxu0
    %220 = vdwg.mxu0
    %v221 = vmax.f32 %v179, 0.0
    %v222 = vmax.f32 %v192, 0.0
    %v223 = vmax.f32 %v205, 0.0
    %v224 = vmax.f32 %v218, 0.0
    %v225 = vpack.c.bf16 %v221, %v221
    %v226 = vpack.c.bf16 %v222, %v222
    %v227 = vpack.c.bf16 %v223, %v223
    %v228 = vpack.c.bf16 %v224, %v224
    %v229 = vld [vmem:[#allocation8] sm:$0xff]
    %v230 = vld [vmem:[#allocation8 + $0x8] sm:$0xf]
    %v231 = vld [vmem:[#allocation8 + $0xc] sm:$0xff]
    %v232 = vld [vmem:[#allocation8 + $0x14] sm:$0xf]
    %v233 = vld [vmem:[#allocation8 + $0x18] sm:$0xff]
    %v234 = vld [vmem:[#allocation8 + $0x20] sm:$0xf]
    %v235 = vld [vmem:[#allocation8 + $0x24] sm:$0xff]
    %v236 = vld [vmem:[#allocation8 + $0x2c] sm:$0xf]
    %v237 = vld [vmem:[#allocation8 + $0x30] sm:$0xff]
    %v238 = vld [vmem:[#allocation8 + $0x38] sm:$0xf]
    %v239 = vld [vmem:[#allocation8 + $0x3c] sm:$0xff]
    %v240 = vld [vmem:[#allocation8 + $0x44] sm:$0xf]
    %v241 = vld [vmem:[#allocation8 + $0x48] sm:$0xff]
    %v242 = vld [vmem:[#allocation8 + $0x50] sm:$0xf]
    %v243 = vld [vmem:[#allocation8 + $0x54] sm:$0xff]
    %v244 = vld [vmem:[#allocation8 + $0x5c] sm:$0xf]
    %v245 = vld [vmem:[#allocation8 + $0x60] sm:$0xff]
    %v246 = vld [vmem:[#allocation8 + $0x68] sm:$0xf]
    %v247 = vld [vmem:[#allocation8 + $0x6c] sm:$0xff]
    %v248 = vld [vmem:[#allocation8 + $0x74] sm:$0xf]
    %v249 = vld [vmem:[#allocation8 + $0x78] sm:$0xff]
    %v250 = vld [vmem:[#allocation8 + $0x80] sm:$0xf]
    %v251 = vld [vmem:[#allocation8 + $0x84] sm:$0xff]
    %v252 = vld [vmem:[#allocation8 + $0x8c] sm:$0xf]
    %v253 = vld [vmem:[#allocation8 + $0x90] sm:$0xff]
    %v254 = vld [vmem:[#allocation8 + $0x98] sm:$0xf]
    %v255 = vld [vmem:[#allocation8 + $0x9c] sm:$0xff]
    %v256 = vld [vmem:[#allocation8 + $0xa4] sm:$0xf]
    %v257 = vld [vmem:[#allocation8 + $0xa8] sm:$0xff]
    %v258 = vld [vmem:[#allocation8 + $0xb0] sm:$0xf]
    %v259 = vld [vmem:[#allocation8 + $0xb4] sm:$0xff]
    %v260 = vld [vmem:[#allocation8 + $0xbc] sm:$0xf]
    %v261 = vld [vmem:[#allocation8 + $0xc0] sm:$0xff]
    %v262 = vld [vmem:[#allocation8 + $0xc8] sm:$0xf]
    %v263 = vld [vmem:[#allocation8 + $0xcc] sm:$0xff]
    %v264 = vld [vmem:[#allocation8 + $0xd4] sm:$0xf]
    %v265 = vld [vmem:[#allocation8 + $0xd8] sm:$0xff]
    %v266 = vld [vmem:[#allocation8 + $0xe0] sm:$0xf]
    %v267 = vld [vmem:[#allocation8 + $0xe4] sm:$0xff]
    %v268 = vld [vmem:[#allocation8 + $0xec] sm:$0xf]
    %v269 = vld [vmem:[#allocation8 + $0xf0] sm:$0xff]
    %v270 = vld [vmem:[#allocation8 + $0xf8] sm:$0xf]
    %v271 = vld [vmem:[#allocation8 + $0xfc] sm:$0xff]
    %v272 = vld [vmem:[#allocation8 + $0x104] sm:$0xf]
    %v273 = vld [vmem:[#allocation8 + $0x108] sm:$0xff]
    %v274 = vld [vmem:[#allocation8 + $0x110] sm:$0xf]
    %v275 = vld [vmem:[#allocation8 + $0x114] sm:$0xff]
    %v276 = vld [vmem:[#allocation8 + $0x11c] sm:$0xf]
    %v277 = vld [vmem:[#allocation8 + $0x120] sm:$0xff]
    %v278 = vld [vmem:[#allocation8 + $0x128] sm:$0xf]
    %v279 = vld [vmem:[#allocation8 + $0x12c] sm:$0xff]
    %v280 = vld [vmem:[#allocation8 + $0x134] sm:$0xf]
    %v281 = vld [vmem:[#allocation8 + $0x138] sm:$0xff]
    %v282 = vld [vmem:[#allocation8 + $0x140] sm:$0xf]
    %v283 = vld [vmem:[#allocation8 + $0x144] sm:$0xff]
    %v284 = vld [vmem:[#allocation8 + $0x14c] sm:$0xf]
    %v285 = vld [vmem:[#allocation8 + $0x150] sm:$0xff]
    %v286 = vld [vmem:[#allocation8 + $0x158] sm:$0xf]
    %v287 = vld [vmem:[#allocation8 + $0x15c] sm:$0xff]
    %v288 = vld [vmem:[#allocation8 + $0x164] sm:$0xf]
    %v289 = vld [vmem:[#allocation8 + $0x168] sm:$0xff]
    %v290 = vld [vmem:[#allocation8 + $0x170] sm:$0xf]
    %v291 = vld [vmem:[#allocation8 + $0x174] sm:$0xff]
    %v292 = vld [vmem:[#allocation8 + $0x17c] sm:$0xf]
    %v293 = vld [vmem:[#allocation8 + $0x180] sm:$0xff]
    %v294 = vld [vmem:[#allocation8 + $0x188] sm:$0xf]
    %v295 = vld [vmem:[#allocation8 + $0x18c] sm:$0xff]
    %v296 = vld [vmem:[#allocation8 + $0x194] sm:$0xf]
    %v297 = vld [vmem:[#allocation8 + $0x198] sm:$0xff]
    %v298 = vld [vmem:[#allocation8 + $0x1a0] sm:$0xf]
    %v299 = vld [vmem:[#allocation8 + $0x1a4] sm:$0xff]
    %v300 = vld [vmem:[#allocation8 + $0x1ac] sm:$0xf]
    %v301 = vld [vmem:[#allocation8 + $0x1b0] sm:$0xff]
    %v302 = vld [vmem:[#allocation8 + $0x1b8] sm:$0xf]
    %v303 = vld [vmem:[#allocation8 + $0x1bc] sm:$0xff]
    %v304 = vld [vmem:[#allocation8 + $0x1c4] sm:$0xf]
    %v305 = vld [vmem:[#allocation8 + $0x1c8] sm:$0xff]
    %v306 = vld [vmem:[#allocation8 + $0x1d0] sm:$0xf]
    %v307 = vld [vmem:[#allocation8 + $0x1d4] sm:$0xff]
    %v308 = vld [vmem:[#allocation8 + $0x1dc] sm:$0xf]
    %v309 = vld [vmem:[#allocation8 + $0x1e0] sm:$0xff]
    %v310 = vld [vmem:[#allocation8 + $0x1e8] sm:$0xf]
    %v311 = vld [vmem:[#allocation8 + $0x1ec] sm:$0xff]
    %v312 = vld [vmem:[#allocation8 + $0x1f4] sm:$0xf]
    %v313 = vld [vmem:[#allocation8 + $0x1f8] sm:$0xff]
    %v314 = vld [vmem:[#allocation8 + $0x200] sm:$0xf]
    %v315 = vld [vmem:[#allocation8 + $0x204] sm:$0xff]
    %v316 = vld [vmem:[#allocation8 + $0x20c] sm:$0xf]
    %v317 = vld [vmem:[#allocation8 + $0x210] sm:$0xff]
    %v318 = vld [vmem:[#allocation8 + $0x218] sm:$0xf]
    %v319 = vld [vmem:[#allocation8 + $0x21c] sm:$0xff]
    %v320 = vld [vmem:[#allocation8 + $0x224] sm:$0xf]
    %v321 = vld [vmem:[#allocation8 + $0x228] sm:$0xff]
    %v322 = vld [vmem:[#allocation8 + $0x230] sm:$0xf]
    %v323 = vld [vmem:[#allocation8 + $0x234] sm:$0xff]
    %v324 = vld [vmem:[#allocation8 + $0x23c] sm:$0xf]
    %v325 = vld [vmem:[#allocation8 + $0x240] sm:$0xff]
    %v326 = vld [vmem:[#allocation8 + $0x248] sm:$0xf]
    %v327 = vld [vmem:[#allocation8 + $0x24c] sm:$0xff]
    %v328 = vld [vmem:[#allocation8 + $0x254] sm:$0xf]
    %v329 = vld [vmem:[#allocation8 + $0x258] sm:$0xff]
    %v330 = vld [vmem:[#allocation8 + $0x260] sm:$0xf]
    %v331 = vld [vmem:[#allocation8 + $0x264] sm:$0xff]
    %v332 = vld [vmem:[#allocation8 + $0x26c] sm:$0xf]
    %v333 = vld [vmem:[#allocation8 + $0x270] sm:$0xff]
    %v334 = vld [vmem:[#allocation8 + $0x278] sm:$0xf]
    %v335 = vld [vmem:[#allocation8 + $0x27c] sm:$0xff]
    %v336 = vld [vmem:[#allocation8 + $0x284] sm:$0xf]
    %v337 = vld [vmem:[#allocation8 + $0x288] sm:$0xff]
    %v338 = vld [vmem:[#allocation8 + $0x290] sm:$0xf]
    %v339 = vld [vmem:[#allocation8 + $0x294] sm:$0xff]
    %v340 = vld [vmem:[#allocation8 + $0x29c] sm:$0xf]
    %v341 = vld [vmem:[#allocation8 + $0x2a0] sm:$0xff]
    %v342 = vld [vmem:[#allocation8 + $0x2a8] sm:$0xf]
    %v343 = vld [vmem:[#allocation8 + $0x2ac] sm:$0xff]
    %v344 = vld [vmem:[#allocation8 + $0x2b4] sm:$0xf]
    %v345 = vld [vmem:[#allocation8 + $0x2b8] sm:$0xff]
    %v346 = vld [vmem:[#allocation8 + $0x2c0] sm:$0xf]
    %v347 = vld [vmem:[#allocation8 + $0x2c4] sm:$0xff]
    %v348 = vld [vmem:[#allocation8 + $0x2cc] sm:$0xf]
    %v349 = vld [vmem:[#allocation8 + $0x2d0] sm:$0xff]
    %v350 = vld [vmem:[#allocation8 + $0x2d8] sm:$0xf]
    %v351 = vld [vmem:[#allocation8 + $0x2dc] sm:$0xff]
    %v352 = vld [vmem:[#allocation8 + $0x2e4] sm:$0xf]
    %v353 = vld [vmem:[#allocation8 + $0x2e8] sm:$0xff]
    %v354 = vld [vmem:[#allocation8 + $0x2f0] sm:$0xf]
    %v355 = vld [vmem:[#allocation8 + $0x2f4] sm:$0xff]
    %v356 = vld [vmem:[#allocation8 + $0x2fc] sm:$0xf]
    %v357 = vld [vmem:[%s4] sm:$0x7]
    %v359 = vperm.slane %v357, 0
    %v360 = vperm.slane %v357, 1
    %v361 = vperm.slane %v357, 2
    %v493 = vunpack.c.l.b16 %v229
    %v494 = vunpack.c.h.b16 %v229
    %v495 = vunpack.c.l.b16 %v230
    %v496 = vunpack.c.l.b16 %v231
    %v497 = vunpack.c.h.b16 %v231
    %v498 = vunpack.c.l.b16 %v232
    %v499 = vunpack.c.l.b16 %v233
    %v500 = vunpack.c.h.b16 %v233
    %v501 = vunpack.c.l.b16 %v234
    %v502 = vunpack.c.l.b16 %v235
    %v503 = vunpack.c.h.b16 %v235
    %v504 = vunpack.c.l.b16 %v236
    %v505 = vunpack.c.l.b16 %v237
    %v506 = vunpack.c.h.b16 %v237
    %v507 = vunpack.c.l.b16 %v238
    %v508 = vunpack.c.l.b16 %v239
    %v509 = vunpack.c.h.b16 %v239
    %v510 = vunpack.c.l.b16 %v240
    %v511 = vunpack.c.l.b16 %v241
    %v512 = vunpack.c.h.b16 %v241
    %v513 = vunpack.c.l.b16 %v242
    %v514 = vunpack.c.l.b16 %v243
    %v515 = vunpack.c.h.b16 %v243
    %v516 = vunpack.c.l.b16 %v244
    %v517 = vunpack.c.l.b16 %v245
    %v518 = vunpack.c.h.b16 %v245
    %v519 = vunpack.c.l.b16 %v246
    %v520 = vunpack.c.l.b16 %v247
    %v521 = vunpack.c.h.b16 %v247
    %v522 = vunpack.c.l.b16 %v248
    %v523 = vunpack.c.l.b16 %v249
    %v524 = vunpack.c.h.b16 %v249
    %v525 = vunpack.c.l.b16 %v250
    %v526 = vunpack.c.l.b16 %v251
    %v527 = vunpack.c.h.b16 %v251
    %v528 = vunpack.c.l.b16 %v252
    %v529 = vunpack.c.l.b16 %v253
    %v530 = vunpack.c.h.b16 %v253
    %v531 = vunpack.c.l.b16 %v254
    %v532 = vunpack.c.l.b16 %v255
    %v533 = vunpack.c.h.b16 %v255
    %v534 = vunpack.c.l.b16 %v256
    %v535 = vunpack.c.l.b16 %v257
    %v536 = vunpack.c.h.b16 %v257
    %v537 = vunpack.c.l.b16 %v258
    %v538 = vunpack.c.l.b16 %v259
    %v539 = vunpack.c.h.b16 %v259
    %v540 = vunpack.c.l.b16 %v260
    %v541 = vunpack.c.l.b16 %v261
    %v542 = vunpack.c.h.b16 %v261
    %v543 = vunpack.c.l.b16 %v262
    %v544 = vunpack.c.l.b16 %v263
    %v545 = vunpack.c.h.b16 %v263
    %v546 = vunpack.c.l.b16 %v264
    %v547 = vunpack.c.l.b16 %v265
    %v548 = vunpack.c.h.b16 %v265
    %v549 = vunpack.c.l.b16 %v266
    %v550 = vunpack.c.l.b16 %v267
    %v551 = vunpack.c.h.b16 %v267
    %v552 = vunpack.c.l.b16 %v268
    %v553 = vunpack.c.l.b16 %v269
    %v554 = vunpack.c.h.b16 %v269
    %v555 = vunpack.c.l.b16 %v270
    %v556 = vunpack.c.l.b16 %v271
    %v557 = vunpack.c.h.b16 %v271
    %v558 = vunpack.c.l.b16 %v272
    %v559 = vunpack.c.l.b16 %v273
    %v560 = vunpack.c.h.b16 %v273
    %v561 = vunpack.c.l.b16 %v274
    %v562 = vunpack.c.l.b16 %v275
    %v563 = vunpack.c.h.b16 %v275
    %v564 = vunpack.c.l.b16 %v276
    %v565 = vunpack.c.l.b16 %v277
    %v566 = vunpack.c.h.b16 %v277
    %v567 = vunpack.c.l.b16 %v278
    %v568 = vunpack.c.l.b16 %v279
    %v569 = vunpack.c.h.b16 %v279
    %v570 = vunpack.c.l.b16 %v280
    %v571 = vunpack.c.l.b16 %v281
    %v572 = vunpack.c.h.b16 %v281
    %v573 = vunpack.c.l.b16 %v282
    %v574 = vunpack.c.l.b16 %v283
    %v575 = vunpack.c.h.b16 %v283
    %v576 = vunpack.c.l.b16 %v284
    %v577 = vunpack.c.l.b16 %v285
    %v578 = vunpack.c.h.b16 %v285
    %v579 = vunpack.c.l.b16 %v286
    %v580 = vunpack.c.l.b16 %v287
    %v581 = vunpack.c.h.b16 %v287
    %v582 = vunpack.c.l.b16 %v288
    %v583 = vunpack.c.l.b16 %v289
    %v584 = vunpack.c.h.b16 %v289
    %v585 = vunpack.c.l.b16 %v290
    %v586 = vunpack.c.l.b16 %v291
    %v587 = vunpack.c.h.b16 %v291
    %v588 = vunpack.c.l.b16 %v292
    %v589 = vunpack.c.l.b16 %v293
    %v590 = vunpack.c.h.b16 %v293
    %v591 = vunpack.c.l.b16 %v294
    %v592 = vunpack.c.l.b16 %v295
    %v593 = vunpack.c.h.b16 %v295
    %v594 = vunpack.c.l.b16 %v296
    %v595 = vunpack.c.l.b16 %v297
    %v596 = vunpack.c.h.b16 %v297
    %v597 = vunpack.c.l.b16 %v298
    %v598 = vunpack.c.l.b16 %v299
    %v599 = vunpack.c.h.b16 %v299
    %v600 = vunpack.c.l.b16 %v300
    %v601 = vunpack.c.l.b16 %v301
    %v602 = vunpack.c.h.b16 %v301
    %v603 = vunpack.c.l.b16 %v302
    %v604 = vunpack.c.l.b16 %v303
    %v605 = vunpack.c.h.b16 %v303
    %v606 = vunpack.c.l.b16 %v304
    %v607 = vunpack.c.l.b16 %v305
    %v608 = vunpack.c.h.b16 %v305
    %v609 = vunpack.c.l.b16 %v306
    %v610 = vunpack.c.l.b16 %v307
    %v611 = vunpack.c.h.b16 %v307
    %v612 = vunpack.c.l.b16 %v308
    %v613 = vunpack.c.l.b16 %v309
    %v614 = vunpack.c.h.b16 %v309
    %v615 = vunpack.c.l.b16 %v310
    %v616 = vunpack.c.l.b16 %v311
    %v617 = vunpack.c.h.b16 %v311
    %v618 = vunpack.c.l.b16 %v312
    %v619 = vunpack.c.l.b16 %v313
    %v620 = vunpack.c.h.b16 %v313
    %v621 = vunpack.c.l.b16 %v314
    %v622 = vunpack.c.l.b16 %v315
    %v623 = vunpack.c.h.b16 %v315
    %v624 = vunpack.c.l.b16 %v316
    %v625 = vunpack.c.l.b16 %v317
    %v626 = vunpack.c.h.b16 %v317
    %v627 = vunpack.c.l.b16 %v318
    %v628 = vunpack.c.l.b16 %v319
    %v629 = vunpack.c.h.b16 %v319
    %v630 = vunpack.c.l.b16 %v320
    %v631 = vunpack.c.l.b16 %v321
    %v632 = vunpack.c.h.b16 %v321
    %v633 = vunpack.c.l.b16 %v322
    %v634 = vunpack.c.l.b16 %v323
    %v635 = vunpack.c.h.b16 %v323
    %v636 = vunpack.c.l.b16 %v324
    %v637 = vunpack.c.l.b16 %v325
    %v638 = vunpack.c.h.b16 %v325
    %v639 = vunpack.c.l.b16 %v326
    %v640 = vunpack.c.l.b16 %v327
    %v641 = vunpack.c.h.b16 %v327
    %v642 = vunpack.c.l.b16 %v328
    %v643 = vunpack.c.l.b16 %v329
    %v644 = vunpack.c.h.b16 %v329
    %v645 = vunpack.c.l.b16 %v330
    %v646 = vunpack.c.l.b16 %v331
    %v647 = vunpack.c.h.b16 %v331
    %v648 = vunpack.c.l.b16 %v332
    %v649 = vunpack.c.l.b16 %v333
    %v650 = vunpack.c.h.b16 %v333
    %v651 = vunpack.c.l.b16 %v334
    %v652 = vunpack.c.l.b16 %v335
    %v653 = vunpack.c.h.b16 %v335
    %v654 = vunpack.c.l.b16 %v336
    %v655 = vunpack.c.l.b16 %v337
    %v656 = vunpack.c.h.b16 %v337
    %v657 = vunpack.c.l.b16 %v338
    %v658 = vunpack.c.l.b16 %v339
    %v659 = vunpack.c.h.b16 %v339
    %v660 = vunpack.c.l.b16 %v340
    %v661 = vunpack.c.l.b16 %v341
    %v662 = vunpack.c.h.b16 %v341
    %v663 = vunpack.c.l.b16 %v342
    %v664 = vunpack.c.l.b16 %v343
    %v665 = vunpack.c.h.b16 %v343
    %v666 = vunpack.c.l.b16 %v344
    %v667 = vunpack.c.l.b16 %v345
    %v668 = vunpack.c.h.b16 %v345
    %v669 = vunpack.c.l.b16 %v346
    %v670 = vunpack.c.l.b16 %v347
    %v671 = vunpack.c.h.b16 %v347
    %v672 = vunpack.c.l.b16 %v348
    %v673 = vunpack.c.l.b16 %v349
    %v674 = vunpack.c.h.b16 %v349
    %v675 = vunpack.c.l.b16 %v350
    %v676 = vunpack.c.l.b16 %v351
    %v677 = vunpack.c.h.b16 %v351
    %v678 = vunpack.c.l.b16 %v352
    %v679 = vunpack.c.l.b16 %v353
    %v680 = vunpack.c.h.b16 %v353
    %v681 = vunpack.c.l.b16 %v354
    %v682 = vunpack.c.l.b16 %v355
    %v683 = vunpack.c.h.b16 %v355
    %v684 = vunpack.c.l.b16 %v356
    %v685 = vpack.c.b16 %v496, %v493
    %v686 = vpack.c.b16 %v497, %v494
    %v687 = vpack.c.b16 %v498, %v495
    %v688 = vpack.c.b16 %v502, %v499
    %v689 = vpack.c.b16 %v503, %v500
    %v690 = vpack.c.b16 %v504, %v501
    %v691 = vpack.c.b16 %v508, %v505
    %v692 = vpack.c.b16 %v509, %v506
    %v693 = vpack.c.b16 %v510, %v507
    %v694 = vpack.c.b16 %v514, %v511
    %v695 = vpack.c.b16 %v515, %v512
    %v696 = vpack.c.b16 %v516, %v513
    %v697 = vpack.c.b16 %v520, %v517
    %v698 = vpack.c.b16 %v521, %v518
    %v699 = vpack.c.b16 %v522, %v519
    %v700 = vpack.c.b16 %v526, %v523
    %v701 = vpack.c.b16 %v527, %v524
    %v702 = vpack.c.b16 %v528, %v525
    %v703 = vpack.c.b16 %v532, %v529
    %v704 = vpack.c.b16 %v533, %v530
    %v705 = vpack.c.b16 %v534, %v531
    %v706 = vpack.c.b16 %v538, %v535
    %v707 = vpack.c.b16 %v539, %v536
    %v708 = vpack.c.b16 %v540, %v537
    %v709 = vpack.c.b16 %v544, %v541
    %v710 = vpack.c.b16 %v545, %v542
    %v711 = vpack.c.b16 %v546, %v543
    %v712 = vpack.c.b16 %v550, %v547
    %v713 = vpack.c.b16 %v551, %v548
    %v714 = vpack.c.b16 %v552, %v549
    %v715 = vpack.c.b16 %v556, %v553
    %v716 = vpack.c.b16 %v557, %v554
    %v717 = vpack.c.b16 %v558, %v555
    %v718 = vpack.c.b16 %v562, %v559
    %v719 = vpack.c.b16 %v563, %v560
    %v720 = vpack.c.b16 %v564, %v561
    %v721 = vpack.c.b16 %v568, %v565
    %v722 = vpack.c.b16 %v569, %v566
    %v723 = vpack.c.b16 %v570, %v567
    %v724 = vpack.c.b16 %v574, %v571
    %v725 = vpack.c.b16 %v575, %v572
    %v726 = vpack.c.b16 %v576, %v573
    %v727 = vpack.c.b16 %v580, %v577
    %v728 = vpack.c.b16 %v581, %v578
    %v729 = vpack.c.b16 %v582, %v579
    %v730 = vpack.c.b16 %v586, %v583
    %v731 = vpack.c.b16 %v587, %v584
    %v732 = vpack.c.b16 %v588, %v585
    %v733 = vpack.c.b16 %v592, %v589
    %v734 = vpack.c.b16 %v593, %v590
    %v735 = vpack.c.b16 %v594, %v591
    %v736 = vpack.c.b16 %v598, %v595
    %v737 = vpack.c.b16 %v599, %v596
    %v738 = vpack.c.b16 %v600, %v597
    %v739 = vpack.c.b16 %v604, %v601
    %v740 = vpack.c.b16 %v605, %v602
    %v741 = vpack.c.b16 %v606, %v603
    %v742 = vpack.c.b16 %v610, %v607
    %v743 = vpack.c.b16 %v611, %v608
    %v744 = vpack.c.b16 %v612, %v609
    %v745 = vpack.c.b16 %v616, %v613
    %v746 = vpack.c.b16 %v617, %v614
    %v747 = vpack.c.b16 %v618, %v615
    %v748 = vpack.c.b16 %v622, %v619
    %v749 = vpack.c.b16 %v623, %v620
    %v750 = vpack.c.b16 %v624, %v621
    %v751 = vpack.c.b16 %v628, %v625
    %v752 = vpack.c.b16 %v629, %v626
    %v753 = vpack.c.b16 %v630, %v627
    %v754 = vpack.c.b16 %v634, %v631
    %v755 = vpack.c.b16 %v635, %v632
    %v756 = vpack.c.b16 %v636, %v633
    %v757 = vpack.c.b16 %v640, %v637
    %v758 = vpack.c.b16 %v641, %v638
    %v759 = vpack.c.b16 %v642, %v639
    %v760 = vpack.c.b16 %v646, %v643
    %v761 = vpack.c.b16 %v647, %v644
    %v762 = vpack.c.b16 %v648, %v645
    %v763 = vpack.c.b16 %v652, %v649
    %v764 = vpack.c.b16 %v653, %v650
    %v765 = vpack.c.b16 %v654, %v651
    %v766 = vpack.c.b16 %v658, %v655
    %v767 = vpack.c.b16 %v659, %v656
    %v768 = vpack.c.b16 %v660, %v657
    %v769 = vpack.c.b16 %v664, %v661
    %v770 = vpack.c.b16 %v665, %v662
    %v771 = vpack.c.b16 %v666, %v663
    %v772 = vpack.c.b16 %v670, %v667
    %v773 = vpack.c.b16 %v671, %v668
    %v774 = vpack.c.b16 %v672, %v669
    %v775 = vpack.c.b16 %v676, %v673
    %v776 = vpack.c.b16 %v677, %v674
    %v777 = vpack.c.b16 %v678, %v675
    %v778 = vpack.c.b16 %v682, %v679
    %v779 = vpack.c.b16 %v683, %v680
    %v780 = vpack.c.b16 %v684, %v681
    %877 = vmatpush.bf16.msra.mxu0 %v706
    %878 = vmatpush.bf16.msra.mxu0 %v703
    %879 = vmatpush.bf16.msra.mxu0 %v700
    %880 = vmatpush.bf16.msra.mxu0 %v697
    %881 = vmatpush.bf16.msra.mxu0 %v694
    %882 = vmatpush.bf16.msra.mxu0 %v691
    %883 = vmatpush.bf16.msra.mxu0 %v688
    %884 = vmatpush.bf16.msra.mxu0 %v685
    %885 = vmatmul.bf16.gmra.mxu0 %v225
    %v886 = vpop.f32.mrf.mxu0
    %v887 = vadd.f32 %v359, %v886
    %v888 = vpop.f32.mrf.mxu0
    %889 = vdwg.mxu0
    %890 = vmatpush.bf16.msra.mxu0 %v730
    %891 = vmatpush.bf16.msra.mxu0 %v727
    %892 = vmatpush.bf16.msra.mxu0 %v724
    %893 = vmatpush.bf16.msra.mxu0 %v721
    %894 = vmatpush.bf16.msra.mxu0 %v718
    %895 = vmatpush.bf16.msra.mxu0 %v715
    %896 = vmatpush.bf16.msra.mxu0 %v712
    %897 = vmatpush.bf16.msra.mxu0 %v709
    %898 = vmatmul.bf16.gmra.mxu0 %v226
    %v899 = vpop.f32.mrf.mxu0
    %v900 = vadd.f32 %v887, %v899
    %v901 = vpop.f32.mrf.mxu0
    %902 = vdwg.mxu0
    %903 = vmatpush.bf16.msra.mxu0 %v754
    %904 = vmatpush.bf16.msra.mxu0 %v751
    %905 = vmatpush.bf16.msra.mxu0 %v748
    %906 = vmatpush.bf16.msra.mxu0 %v745
    %907 = vmatpush.bf16.msra.mxu0 %v742
    %908 = vmatpush.bf16.msra.mxu0 %v739
    %909 = vmatpush.bf16.msra.mxu0 %v736
    %910 = vmatpush.bf16.msra.mxu0 %v733
    %911 = vmatmul.bf16.gmra.mxu0 %v227
    %v912 = vpop.f32.mrf.mxu0
    %v913 = vadd.f32 %v900, %v912
    %v914 = vpop.f32.mrf.mxu0
    %915 = vdwg.mxu0
    %916 = vmatpush.bf16.msra.mxu0 %v778
    %917 = vmatpush.bf16.msra.mxu0 %v775
    %918 = vmatpush.bf16.msra.mxu0 %v772
    %919 = vmatpush.bf16.msra.mxu0 %v769
    %920 = vmatpush.bf16.msra.mxu0 %v766
    %921 = vmatpush.bf16.msra.mxu0 %v763
    %922 = vmatpush.bf16.msra.mxu0 %v760
    %923 = vmatpush.bf16.msra.mxu0 %v757
    %924 = vmatmul.bf16.gmra.mxu0 %v228
    %v925 = vpop.f32.mrf.mxu0
    %v926 = vadd.f32 %v913, %v925
    %v927 = vpop.f32.mrf.mxu0
    %928 = vdwg.mxu0
    %929 = vmatpush.bf16.msra.mxu0 %v707
    %930 = vmatpush.bf16.msra.mxu0 %v704
    %931 = vmatpush.bf16.msra.mxu0 %v701
    %932 = vmatpush.bf16.msra.mxu0 %v698
    %933 = vmatpush.bf16.msra.mxu0 %v695
    %934 = vmatpush.bf16.msra.mxu0 %v692
    %935 = vmatpush.bf16.msra.mxu0 %v689
    %936 = vmatpush.bf16.msra.mxu0 %v686
    %937 = vmatmul.bf16.gmra.mxu0 %v225
    %v938 = vpop.f32.mrf.mxu0
    %v939 = vadd.f32 %v360, %v938
    %v940 = vpop.f32.mrf.mxu0
    %941 = vdwg.mxu0
    %942 = vmatpush.bf16.msra.mxu0 %v731
    %943 = vmatpush.bf16.msra.mxu0 %v728
    %944 = vmatpush.bf16.msra.mxu0 %v725
    %945 = vmatpush.bf16.msra.mxu0 %v722
    %946 = vmatpush.bf16.msra.mxu0 %v719
    %947 = vmatpush.bf16.msra.mxu0 %v716
    %948 = vmatpush.bf16.msra.mxu0 %v713
    %949 = vmatpush.bf16.msra.mxu0 %v710
    %950 = vmatmul.bf16.gmra.mxu0 %v226
    %v951 = vpop.f32.mrf.mxu0
    %v952 = vadd.f32 %v939, %v951
    %v953 = vpop.f32.mrf.mxu0
    %954 = vdwg.mxu0
    %955 = vmatpush.bf16.msra.mxu0 %v755
    %956 = vmatpush.bf16.msra.mxu0 %v752
    %957 = vmatpush.bf16.msra.mxu0 %v749
    %958 = vmatpush.bf16.msra.mxu0 %v746
    %959 = vmatpush.bf16.msra.mxu0 %v743
    %960 = vmatpush.bf16.msra.mxu0 %v740
    %961 = vmatpush.bf16.msra.mxu0 %v737
    %962 = vmatpush.bf16.msra.mxu0 %v734
    %963 = vmatmul.bf16.gmra.mxu0 %v227
    %v964 = vpop.f32.mrf.mxu0
    %v965 = vadd.f32 %v952, %v964
    %v966 = vpop.f32.mrf.mxu0
    %967 = vdwg.mxu0
    %968 = vmatpush.bf16.msra.mxu0 %v779
    %969 = vmatpush.bf16.msra.mxu0 %v776
    %970 = vmatpush.bf16.msra.mxu0 %v773
    %971 = vmatpush.bf16.msra.mxu0 %v770
    %972 = vmatpush.bf16.msra.mxu0 %v767
    %973 = vmatpush.bf16.msra.mxu0 %v764
    %974 = vmatpush.bf16.msra.mxu0 %v761
    %975 = vmatpush.bf16.msra.mxu0 %v758
    %976 = vmatmul.bf16.gmra.mxu0 %v228
    %v977 = vpop.f32.mrf.mxu0
    %v978 = vadd.f32 %v965, %v977
    %v979 = vpop.f32.mrf.mxu0
    %980 = vdwg.mxu0
    %981 = vmatpush.bf16.msra.mxu0 %v708
    %982 = vmatpush.bf16.msra.mxu0 %v705
    %983 = vmatpush.bf16.msra.mxu0 %v702
    %984 = vmatpush.bf16.msra.mxu0 %v699
    %985 = vmatpush.bf16.msra.mxu0 %v696
    %986 = vmatpush.bf16.msra.mxu0 %v693
    %987 = vmatpush.bf16.msra.mxu0 %v690
    %988 = vmatpush.bf16.msra.mxu0 %v687
    %989 = vmatmul.bf16.gmra.mxu0 %v225
    %v990 = vpop.f32.mrf.mxu0
    %v991 = vadd.f32 %v361, %v990
    %v992 = vpop.f32.mrf.mxu0
    %993 = vdwg.mxu0
    %994 = vmatpush.bf16.msra.mxu0 %v732
    %995 = vmatpush.bf16.msra.mxu0 %v729
    %996 = vmatpush.bf16.msra.mxu0 %v726
    %997 = vmatpush.bf16.msra.mxu0 %v723
    %998 = vmatpush.bf16.msra.mxu0 %v720
    %999 = vmatpush.bf16.msra.mxu0 %v717
    %1000 = vmatpush.bf16.msra.mxu0 %v714
    %1001 = vmatpush.bf16.msra.mxu0 %v711
    %1002 = vmatmul.bf16.gmra.mxu0 %v226
    %v1003 = vpop.f32.mrf.mxu0
    %v1004 = vadd.f32 %v991, %v1003
    %v1005 = vpop.f32.mrf.mxu0
    %1006 = vdwg.mxu0
    %1007 = vmatpush.bf16.msra.mxu0 %v756
    %1008 = vmatpush.bf16.msra.mxu0 %v753
    %1009 = vmatpush.bf16.msra.mxu0 %v750
    %1010 = vmatpush.bf16.msra.mxu0 %v747
    %1011 = vmatpush.bf16.msra.mxu0 %v744
    %1012 = vmatpush.bf16.msra.mxu0 %v741
    %1013 = vmatpush.bf16.msra.mxu0 %v738
    %1014 = vmatpush.bf16.msra.mxu0 %v735
    %1015 = vmatmul.bf16.gmra.mxu0 %v227
    %v1016 = vpop.f32.mrf.mxu0
    %v1017 = vadd.f32 %v1004, %v1016
    %v1018 = vpop.f32.mrf.mxu0
    %1019 = vdwg.mxu0
    %1020 = vmatpush.bf16.msra.mxu0 %v780
    %1021 = vmatpush.bf16.msra.mxu0 %v777
    %1022 = vmatpush.bf16.msra.mxu0 %v774
    %1023 = vmatpush.bf16.msra.mxu0 %v771
    %1024 = vmatpush.bf16.msra.mxu0 %v768
    %1025 = vmatpush.bf16.msra.mxu0 %v765
    %1026 = vmatpush.bf16.msra.mxu0 %v762
    %1027 = vmatpush.bf16.msra.mxu0 %v759
    %1028 = vmatmul.bf16.gmra.mxu0 %v228
    %v1029 = vpop.f32.mrf.mxu0
    %v1030 = vadd.f32 %v1017, %v1029
    %v1031 = vpop.f32.mrf.mxu0
    %1032 = vdwg.mxu0
    %v1033 = vmax.f32 %v926, 0.0
    %v1034 = vmax.f32 %v978, 0.0
    %v1035 = vmax.f32 %v1030, 0.0
    %v1036 = vpack.c.bf16 %v1033, %v1033
    %v1037 = vpack.c.bf16 %v1034, %v1034
    %v1038 = vpack.c.bf16 %v1035, %v1035
    %v1039 = vld [vmem:[#allocation10] sm:$0xf]
    %v1040 = vld [vmem:[#allocation10 + $0x4] sm:$0xf]
    %v1041 = vld [vmem:[#allocation10 + $0x8] sm:$0xf]
    %v1042 = vld [vmem:[#allocation10 + $0xc] sm:$0xf]
    %v1043 = vld [vmem:[#allocation10 + $0x10] sm:$0xf]
    %v1044 = vld [vmem:[#allocation10 + $0x14] sm:$0xf]
    %v1045 = vld [vmem:[#allocation10 + $0x18] sm:$0xf]
    %v1046 = vld [vmem:[#allocation10 + $0x1c] sm:$0xf]
    %v1047 = vld [vmem:[#allocation10 + $0x20] sm:$0xf]
    %v1048 = vld [vmem:[#allocation10 + $0x24] sm:$0xf]
    %v1049 = vld [vmem:[#allocation10 + $0x28] sm:$0xf]
    %v1050 = vld [vmem:[#allocation10 + $0x2c] sm:$0xf]
    %v1051 = vld [vmem:[#allocation10 + $0x30] sm:$0xf]
    %v1052 = vld [vmem:[#allocation10 + $0x34] sm:$0xf]
    %v1053 = vld [vmem:[#allocation10 + $0x38] sm:$0xf]
    %v1054 = vld [vmem:[#allocation10 + $0x3c] sm:$0xf]
    %v1055 = vld [vmem:[#allocation10 + $0x40] sm:$0xf]
    %v1056 = vld [vmem:[#allocation10 + $0x44] sm:$0xf]
    %v1057 = vld [vmem:[#allocation10 + $0x48] sm:$0xf]
    %v1058 = vld [vmem:[#allocation10 + $0x4c] sm:$0xf]
    %v1059 = vld [vmem:[#allocation10 + $0x50] sm:$0xf]
    %v1060 = vld [vmem:[#allocation10 + $0x54] sm:$0xf]
    %v1061 = vld [vmem:[#allocation10 + $0x58] sm:$0xf]
    %v1062 = vld [vmem:[#allocation10 + $0x5c] sm:$0xf]
    %v1063 = vld [vmem:[#allocation10 + $0x60] sm:$0xf]
    %v1064 = vld [vmem:[#allocation10 + $0x64] sm:$0xf]
    %v1065 = vld [vmem:[#allocation10 + $0x68] sm:$0xf]
    %v1066 = vld [vmem:[#allocation10 + $0x6c] sm:$0xf]
    %v1067 = vld [vmem:[#allocation10 + $0x70] sm:$0xf]
    %v1068 = vld [vmem:[#allocation10 + $0x74] sm:$0xf]
    %v1069 = vld [vmem:[#allocation10 + $0x78] sm:$0xf]
    %v1070 = vld [vmem:[#allocation10 + $0x7c] sm:$0xf]
    %v1071 = vld [vmem:[#allocation10 + $0x80] sm:$0xf]
    %v1072 = vld [vmem:[#allocation10 + $0x84] sm:$0xf]
    %v1073 = vld [vmem:[#allocation10 + $0x88] sm:$0xf]
    %v1074 = vld [vmem:[#allocation10 + $0x8c] sm:$0xf]
    %v1075 = vld [vmem:[#allocation10 + $0x90] sm:$0xf]
    %v1076 = vld [vmem:[#allocation10 + $0x94] sm:$0xf]
    %v1077 = vld [vmem:[#allocation10 + $0x98] sm:$0xf]
    %v1078 = vld [vmem:[#allocation10 + $0x9c] sm:$0xf]
    %v1079 = vld [vmem:[#allocation10 + $0xa0] sm:$0xf]
    %v1080 = vld [vmem:[#allocation10 + $0xa4] sm:$0xf]
    %v1081 = vld [vmem:[#allocation10 + $0xa8] sm:$0xf]
    %v1082 = vld [vmem:[#allocation10 + $0xac] sm:$0xf]
    %v1083 = vld [vmem:[#allocation10 + $0xb0] sm:$0xf]
    %v1084 = vld [vmem:[#allocation10 + $0xb4] sm:$0xf]
    %v1085 = vld [vmem:[#allocation10 + $0xb8] sm:$0xf]
    %v1086 = vld [vmem:[#allocation10 + $0xbc] sm:$0xf]
    %v1087 = vld [vmem:[%s6] sm:$0x1]
    %v1089 = vperm.slane %v1087, 0
    %v1139 = vunpack.c.l.b16 %v1039
    %v1140 = vunpack.c.l.b16 %v1040
    %v1141 = vunpack.c.l.b16 %v1041
    %v1142 = vunpack.c.l.b16 %v1042
    %v1143 = vunpack.c.l.b16 %v1043
    %v1144 = vunpack.c.l.b16 %v1044
    %v1145 = vunpack.c.l.b16 %v1045
    %v1146 = vunpack.c.l.b16 %v1046
    %v1147 = vunpack.c.l.b16 %v1047
    %v1148 = vunpack.c.l.b16 %v1048
    %v1149 = vunpack.c.l.b16 %v1049
    %v1150 = vunpack.c.l.b16 %v1050
    %v1151 = vunpack.c.l.b16 %v1051
    %v1152 = vunpack.c.l.b16 %v1052
    %v1153 = vunpack.c.l.b16 %v1053
    %v1154 = vunpack.c.l.b16 %v1054
    %v1155 = vunpack.c.l.b16 %v1055
    %v1156 = vunpack.c.l.b16 %v1056
    %v1157 = vunpack.c.l.b16 %v1057
    %v1158 = vunpack.c.l.b16 %v1058
    %v1159 = vunpack.c.l.b16 %v1059
    %v1160 = vunpack.c.l.b16 %v1060
    %v1161 = vunpack.c.l.b16 %v1061
    %v1162 = vunpack.c.l.b16 %v1062
    %v1163 = vunpack.c.l.b16 %v1063
    %v1164 = vunpack.c.l.b16 %v1064
    %v1165 = vunpack.c.l.b16 %v1065
    %v1166 = vunpack.c.l.b16 %v1066
    %v1167 = vunpack.c.l.b16 %v1067
    %v1168 = vunpack.c.l.b16 %v1068
    %v1169 = vunpack.c.l.b16 %v1069
    %v1170 = vunpack.c.l.b16 %v1070
    %v1171 = vunpack.c.l.b16 %v1071
    %v1172 = vunpack.c.l.b16 %v1072
    %v1173 = vunpack.c.l.b16 %v1073
    %v1174 = vunpack.c.l.b16 %v1074
    %v1175 = vunpack.c.l.b16 %v1075
    %v1176 = vunpack.c.l.b16 %v1076
    %v1177 = vunpack.c.l.b16 %v1077
    %v1178 = vunpack.c.l.b16 %v1078
    %v1179 = vunpack.c.l.b16 %v1079
    %v1180 = vunpack.c.l.b16 %v1080
    %v1181 = vunpack.c.l.b16 %v1081
    %v1182 = vunpack.c.l.b16 %v1082
    %v1183 = vunpack.c.l.b16 %v1083
    %v1184 = vunpack.c.l.b16 %v1084
    %v1185 = vunpack.c.l.b16 %v1085
    %v1186 = vunpack.c.l.b16 %v1086
    %v1187 = vpack.c.b16 %v1140, %v1139
    %v1188 = vpack.c.b16 %v1142, %v1141
    %v1189 = vpack.c.b16 %v1144, %v1143
    %v1190 = vpack.c.b16 %v1146, %v1145
    %v1191 = vpack.c.b16 %v1148, %v1147
    %v1192 = vpack.c.b16 %v1150, %v1149
    %v1193 = vpack.c.b16 %v1152, %v1151
    %v1194 = vpack.c.b16 %v1154, %v1153
    %v1195 = vpack.c.b16 %v1156, %v1155
    %v1196 = vpack.c.b16 %v1158, %v1157
    %v1197 = vpack.c.b16 %v1160, %v1159
    %v1198 = vpack.c.b16 %v1162, %v1161
    %v1199 = vpack.c.b16 %v1164, %v1163
    %v1200 = vpack.c.b16 %v1166, %v1165
    %v1201 = vpack.c.b16 %v1168, %v1167
    %v1202 = vpack.c.b16 %v1170, %v1169
    %v1203 = vpack.c.b16 %v1172, %v1171
    %v1204 = vpack.c.b16 %v1174, %v1173
    %v1205 = vpack.c.b16 %v1176, %v1175
    %v1206 = vpack.c.b16 %v1178, %v1177
    %v1207 = vpack.c.b16 %v1180, %v1179
    %v1208 = vpack.c.b16 %v1182, %v1181
    %v1209 = vpack.c.b16 %v1184, %v1183
    %v1210 = vpack.c.b16 %v1186, %v1185
    %1235 = vmatpush.bf16.msra.mxu0 %v1194
    %1236 = vmatpush.bf16.msra.mxu0 %v1193
    %1237 = vmatpush.bf16.msra.mxu0 %v1192
    %1238 = vmatpush.bf16.msra.mxu0 %v1191
    %1239 = vmatpush.bf16.msra.mxu0 %v1190
    %1240 = vmatpush.bf16.msra.mxu0 %v1189
    %1241 = vmatpush.bf16.msra.mxu0 %v1188
    %1242 = vmatpush.bf16.msra.mxu0 %v1187
    %1243 = vmatmul.bf16.gmra.mxu0 %v1036
    %v1244 = vpop.f32.mrf.mxu0
    %v1245 = vadd.f32 %v1089, %v1244
    %v1246 = vpop.f32.mrf.mxu0
    %1247 = vdwg.mxu0
    %1248 = vmatpush.bf16.msra.mxu0 %v1202
    %1249 = vmatpush.bf16.msra.mxu0 %v1201
    %1250 = vmatpush.bf16.msra.mxu0 %v1200
    %1251 = vmatpush.bf16.msra.mxu0 %v1199
    %1252 = vmatpush.bf16.msra.mxu0 %v1198
    %1253 = vmatpush.bf16.msra.mxu0 %v1197
    %1254 = vmatpush.bf16.msra.mxu0 %v1196
    %1255 = vmatpush.bf16.msra.mxu0 %v1195
    %1256 = vmatmul.bf16.gmra.mxu0 %v1037
    %v1257 = vpop.f32.mrf.mxu0
    %v1258 = vadd.f32 %v1245, %v1257
    %v1259 = vpop.f32.mrf.mxu0
    %1260 = vdwg.mxu0
    %1261 = vmatpush.bf16.msra.mxu0 %v1210
    %1262 = vmatpush.bf16.msra.mxu0 %v1209
    %1263 = vmatpush.bf16.msra.mxu0 %v1208
    %1264 = vmatpush.bf16.msra.mxu0 %v1207
    %1265 = vmatpush.bf16.msra.mxu0 %v1206
    %1266 = vmatpush.bf16.msra.mxu0 %v1205
    %1267 = vmatpush.bf16.msra.mxu0 %v1204
    %1268 = vmatpush.bf16.msra.mxu0 %v1203
    %1269 = vmatmul.bf16.gmra.mxu0 %v1038
    %v1270 = vpop.f32.mrf.mxu0
    %v1271 = vadd.f32 %v1258, %v1270
    %v1272 = vpop.f32.mrf.mxu0
    %1273 = vdwg.mxu0
    %v1274 = vtanh.pop %v1271
    %1275 = vst [vmem:[#allocation11] sm:$0x3] %v1274
    // Predicated region
    $region50: #{tpu_custom_call.1} parent=1 // pred_check
      _
    $region51: #{tpu_custom_call.1} parent=1 // pred_check_branch
      %1277 = sbr.rel (0) target = $region53
    $region52: #{tpu_custom_call.1} parent=1 // pred_region
      %1279 = vsyncadd [#allocation4], 0
      %s1281 = sshll.u32 [#allocation11], 4
      %s1282 = int_to_ptr.vmem [resolvable:$true] %s1281
      %s1283 = sshll.u32 %s7, 4
      %s1284 = int_to_ptr.hbm [resolvable:$true] %s1283
      %1286 = dma.vmem_to_hbm [thread:$0]  %s1282, 32, %s1284, [#allocation4]
    $region53: #{tpu_custom_call.1} parent=1 // pred_fallthru
      _
    // Predicated region
    $region54: #{tpu_custom_call.1} parent=1 // pred_check
      _
    $region55: #{tpu_custom_call.1} parent=1 // pred_check_branch
      %1288 = sbr.rel (0) target = $region57
    $region56: #{tpu_custom_call.1} parent=1 // pred_region
      %1290 = dma.done [#allocation4], 32
    $region57: #{tpu_custom_call.1} parent=1 // pred_fallthru
      _
    %1291 = vsyncpa [#allocation3], 1
    %1292 = vsyncpa [#allocation6], 1
    %1293 = vsyncpa [#allocation9], 1
    %1294 = vsyncpa [#allocation4], 1

</llo_original>
